<compile_context>
chip_gen: v6e
topology: v6e:2x2x1
jax: 0.10.0
libtpu: 0.0.40
codegen_flags: <defaults>
</compile_context>

<pallas_src>
import functools

import jax
import jax.numpy as jnp
from jax.experimental import pallas as pl
from jax.experimental.pallas import tpu as pltpu

LANE = 128  # lane width; hidden dim and heads are packed into 128-lane slabs


def sac_rollout_kernel(
    x_ref, h0_ref,
    w1_ref, b1_ref,
    wih_ref, bih_ref, whh_ref, bhh_ref,
    whd_ref, bhd_ref,
    out_ref,
    h_carry,
    *, hidden_dim, n_agents, mxu_dtype,
):
    H, A, L = hidden_dim, n_agents, LANE

    # Initialize the VMEM-resident GRU carry from h0 at the first timestep of this
    # batch tile (grid = (batch_tiles, T), T innermost / sequential).
    @pl.when(pl.program_id(1) == 0)
    def _():
        h_carry[...] = h0_ref[...]

    h = h_carry[...]  # (BT, 128) f32, lanes [H:128) are zero

    # fc1 + ReLU (lane-dense: w1 is (D, 128) zero-padded past H).
    x1 = jnp.dot(x_ref[...].astype(mxu_dtype), w1_ref[...],
                 preferred_element_type=jnp.float32) + b1_ref[...]
    x1 = jnp.maximum(x1, 0.0)

    # GRUCell, PyTorch gate order (r, z, n). Gates are packed at lane offsets
    # 0 / 128 / 256 of the fused (128, 384) weights, so all slices below are
    # vreg-aligned. b_hh's n-segment is inside gh, i.e. added BEFORE the r-multiply
    # (PyTorch GRUCell semantics).
    gi = jnp.dot(x1.astype(mxu_dtype), wih_ref[...],
                 preferred_element_type=jnp.float32) + bih_ref[...]
    gh = jnp.dot(h.astype(mxu_dtype), whh_ref[...],
                 preferred_element_type=jnp.float32) + bhh_ref[...]

    r = jax.nn.sigmoid(gi[:, 0:L] + gh[:, 0:L])
    z = jax.nn.sigmoid(gi[:, L:2 * L] + gh[:, L:2 * L])
    n = jnp.tanh(gi[:, 2 * L:3 * L] + r * gh[:, 2 * L:3 * L])
    h_new = (1.0 - z) * n + z * h          # padded lanes stay exactly 0
    h_carry[...] = h_new

    # Heads (fc2 already folded into whd/bhd offline): one lane-dense (128,128) matmul
    # producing mu at lanes [H, H+A) and log_std pre-activation at [H+A, H+2A).
    heads = jnp.dot(h_new.astype(mxu_dtype), whd_ref[...],
                    preferred_element_type=jnp.float32) + bhd_ref[...]
    lane = jax.lax.broadcasted_iota(jnp.int32, heads.shape, 1)
    is_log_std = jnp.logical_and(lane >= H + A, lane < H + 2 * A)
    log_std = jnp.clip(jnp.maximum(heads, 0.0), -20.0, 2.0)  # relu then clamp(-20, 2)
    heads = jnp.where(is_log_std, log_std, heads)

    # Single lane-dense output slab per step: [ h (0:H) | mu | log_std | 0 ].
    out_ref[...] = jnp.where(lane < H, h_new, heads).astype(out_ref.dtype)


def sac_agent_forward(inputs, hidden_state, packed, *, hidden_dim, n_agents,
                      mxu_dtype=jnp.bfloat16):
    """Fused forward. `inputs` is (B, D) for one step or (T, B, D) for a rollout.

    Returns (mu, log_sigma, h) with leading T axis iff a rollout was given.
    """
    H, A, L = hidden_dim, n_agents, LANE
    assert H + 2 * A <= L

    single_step = inputs.ndim == 2
    x = inputs[None] if single_step else inputs
    T, B, D = x.shape

    def rup(a, m):
        return ((a + m - 1) // m) * m

    BT = min(256, rup(B, 8))      # batch tile (multiple of 8 sublanes)
    BP = rup(B, BT)
    NB = BP // BT

    xp = jnp.zeros((T, BP, D), jnp.float32).at[:, :B, :].set(x.astype(jnp.float32))
    h0p = jnp.zeros((BP, L), jnp.float32).at[:B, :H].set(
        hidden_state.reshape(-1, H).astype(jnp.float32))

    # MXU operands in mxu_dtype (bf16 on v6e/v7x); biases and element-wise math in f32.
    w1 = packed["w1p"].astype(mxu_dtype)
    wih = packed["wihp"].astype(mxu_dtype)
    whh = packed["whhp"].astype(mxu_dtype)
    whd = packed["whdp"].astype(mxu_dtype)
    b1, bih, bhh, bhd = packed["b1p"], packed["bihp"], packed["bhhp"], packed["bhdp"]

    const2 = lambda b, t: (0, 0)   # weights/biases stay VMEM-resident across the grid
    kernel = functools.partial(sac_rollout_kernel, hidden_dim=H, n_agents=A,
                               mxu_dtype=mxu_dtype)

    out = pl.pallas_call(
        kernel,
        grid=(NB, T),
        in_specs=[
            pl.BlockSpec((None, BT, D), lambda b, t: (t, b, 0)),   # x_t
            pl.BlockSpec((BT, L), lambda b, t: (b, 0)),            # h0 (per batch tile)
            pl.BlockSpec((D, L), const2),                          # w1
            pl.BlockSpec((1, L), const2),                          # b1
            pl.BlockSpec((L, 3 * L), const2),                      # w_ih (gate-aligned)
            pl.BlockSpec((1, 3 * L), const2),                      # b_ih
            pl.BlockSpec((L, 3 * L), const2),                      # w_hh
            pl.BlockSpec((1, 3 * L), const2),                      # b_hh
            pl.BlockSpec((L, L), const2),                          # fc2-folded heads W
            pl.BlockSpec((1, L), const2),                          # fc2-folded heads b
        ],
        out_specs=pl.BlockSpec((None, BT, L), lambda b, t: (t, b, 0)),
        out_shape=jax.ShapeDtypeStruct((T, BP, L), jnp.float32),
        scratch_shapes=[pltpu.VMEM((BT, L), jnp.float32)],         # GRU carry
        compiler_params=pltpu.CompilerParams(
            dimension_semantics=("parallel", "arbitrary")),
    )(xp, h0p, w1, b1, wih, bih, whh, bhh, whd, bhd)

    h_seq = out[:, :B, :H]
    mu = out[:, :B, H:H + A]
    log_sigma = out[:, :B, H + A:H + 2 * A]
    if single_step:
        return mu[0], log_sigma[0], h_seq[0]
    return mu, log_sigma, h_seq


def init_params(key, input_shape, hidden_dim, n_agents):
    """PyTorch-shaped synthetic parameters, stored as (in, out) matrices."""
    ks = jax.random.split(key, 12)
    H, A = hidden_dim, n_agents

    def u(k, shape, fan_in):
        bound = 1.0 / jnp.sqrt(jnp.float32(fan_in))
        return jax.random.uniform(k, shape, jnp.float32, -bound, bound)

    return dict(
        w1=u(ks[0], (input_shape, H), input_shape), b1=u(ks[1], (H,), input_shape),
        w_ih=u(ks[2], (H, 3 * H), H), b_ih=u(ks[3], (3 * H,), H),
        w_hh=u(ks[4], (H, 3 * H), H), b_hh=u(ks[5], (3 * H,), H),
        w2=u(ks[6], (H, H), H), b2=u(ks[7], (H,), H),
        w_mu=u(ks[8], (H, A), H), b_mu=u(ks[9], (A,), H),
        w_ls=u(ks[10], (H, A), H), b_ls=u(ks[11], (A,), H),
    )


def pack_params(p):
    """Pack params into the kernel's lane-dense layout and fold fc2 into the heads."""
    D, H = p["w1"].shape
    A = p["w_mu"].shape[1]
    L = LANE

    w1p = jnp.zeros((D, L), jnp.float32).at[:, :H].set(p["w1"])
    b1p = jnp.zeros((1, L), jnp.float32).at[0, :H].set(p["b1"])

    def pack_gru_w(w):   # (H, 3H) -> (L, 3L), gates at lane offsets 0/128/256
        out = jnp.zeros((L, 3 * L), jnp.float32)
        for g in range(3):
            out = out.at[:H, g * L:g * L + H].set(w[:, g * H:(g + 1) * H])
        return out

    def pack_gru_b(b):   # (3H,) -> (1, 3L)
        out = jnp.zeros((1, 3 * L), jnp.float32)
        for g in range(3):
            out = out.at[0, g * L:g * L + H].set(b[g * H:(g + 1) * H])
        return out

    wihp, bihp = pack_gru_w(p["w_ih"]), pack_gru_b(p["b_ih"])
    whhp, bhhp = pack_gru_w(p["w_hh"]), pack_gru_b(p["b_hh"])

    # Fold fc2 (no activation) into the two heads: x2 @ W = h @ (w2 @ W) + (b2 @ W).
    w_mu_f = p["w2"] @ p["w_mu"]
    b_mu_f = p["b2"] @ p["w_mu"] + p["b_mu"]
    w_ls_f = p["w2"] @ p["w_ls"]
    b_ls_f = p["b2"] @ p["w_ls"] + p["b_ls"]

    whdp = (jnp.zeros((L, L), jnp.float32)
            .at[:H, H:H + A].set(w_mu_f)
            .at[:H, H + A:H + 2 * A].set(w_ls_f))
    bhdp = (jnp.zeros((1, L), jnp.float32)
            .at[0, H:H + A].set(b_mu_f)
            .at[0, H + A:H + 2 * A].set(b_ls_f))

    return dict(w1p=w1p, b1p=b1p, wihp=wihp, bihp=bihp, whhp=whhp, bhhp=bhhp,
                whdp=whdp, bhdp=bhdp)


def reference_forward(inputs, hidden_state, p):
    """Pure-JAX reference mirroring the PyTorch module (correctness check)."""
    H = p["w1"].shape[1]
    x1 = jax.nn.relu(inputs @ p["w1"] + p["b1"])
    h = hidden_state.reshape(-1, H)
    gi = x1 @ p["w_ih"] + p["b_ih"]
    gh = h @ p["w_hh"] + p["b_hh"]
    r = jax.nn.sigmoid(gi[:, :H] + gh[:, :H])
    z = jax.nn.sigmoid(gi[:, H:2 * H] + gh[:, H:2 * H])
    n = jnp.tanh(gi[:, 2 * H:] + r * gh[:, 2 * H:])
    h_new = (1.0 - z) * n + z * h
    x2 = h_new @ p["w2"] + p["b2"]
    mu = x2 @ p["w_mu"] + p["b_mu"]
    log_sigma = jnp.clip(jax.nn.relu(x2 @ p["w_ls"] + p["b_ls"]), -20.0, 2.0)
    return mu, log_sigma, h_new


if __name__ == "__main__":
    # Small shapes consistent with the module: batch=2, input_shape=48, hidden_dim=32,
    # n_agents=3, rollout length T=8.
    B, D_IN, HIDDEN, N_AGENTS, T = 2, 48, 32, 3, 8

    key = jax.random.PRNGKey(0)
    k_x, k_h, k_p, k_seq = jax.random.split(key, 4)

    params = init_params(k_p, D_IN, HIDDEN, N_AGENTS)
    packed = pack_params(params)

    inputs = jax.random.normal(k_x, (B, D_IN), jnp.float32)
    h0 = jax.random.normal(k_h, (B, HIDDEN), jnp.float32)

    # 1) Single step, f32 MXU operands: tight check against the reference.
    fwd_f32 = jax.jit(functools.partial(
        sac_agent_forward, hidden_dim=HIDDEN, n_agents=N_AGENTS,
        mxu_dtype=jnp.float32))
    mu, log_sigma, h = jax.block_until_ready(fwd_f32(inputs, h0, packed))
    mu_r, ls_r, h_r = reference_forward(inputs, h0, params)
    assert mu.shape == (B, N_AGENTS)
    assert log_sigma.shape == (B, N_AGENTS)
    assert h.shape == (B, HIDDEN)
    assert jnp.allclose(mu, mu_r, atol=1e-4, rtol=1e-4)
    assert jnp.allclose(log_sigma, ls_r, atol=1e-4, rtol=1e-4)
    assert jnp.allclose(h, h_r, atol=1e-4, rtol=1e-4)

    # 2) Fused T-step rollout, bf16 MXU operands: loose check against a scanned reference.
    xs = jax.random.normal(k_seq, (T, B, D_IN), jnp.float32)
    fwd_bf16 = jax.jit(functools.partial(
        sac_agent_forward, hidden_dim=HIDDEN, n_agents=N_AGENTS,
        mxu_dtype=jnp.bfloat16))
    mu_s, ls_s, h_s = jax.block_until_ready(fwd_bf16(xs, h0, packed))

    def step(h_c, x_t):
        m, l, hn = reference_forward(x_t, h_c, params)
        return hn, (m, l, hn)

    _, (mu_ref, ls_ref, h_ref) = jax.lax.scan(step, h0, xs)
    assert mu_s.shape == (T, B, N_AGENTS)
    assert ls_s.shape == (T, B, N_AGENTS)
    assert h_s.shape == (T, B, HIDDEN)
    assert jnp.allclose(mu_s, mu_ref, atol=5e-2, rtol=5e-2)
    assert jnp.allclose(ls_s, ls_ref, atol=5e-2, rtol=5e-2)
    assert jnp.allclose(h_s, h_ref, atol=5e-2, rtol=5e-2)

    print("KERNEL_OK")
</pallas_src>

<mosaic_0001>
module attributes {stable_mosaic.version = 11 : i64} {
  func.func @sac_rollout_kernel(%arg0: i32, %arg1: i32, %arg2: memref<1x8x48xf32, #tpu.memory_space<vmem>>, %arg3: memref<8x128xf32, #tpu.memory_space<vmem>>, %arg4: memref<48x128xf32, #tpu.memory_space<vmem>>, %arg5: memref<1x128xf32, #tpu.memory_space<vmem>>, %arg6: memref<128x384xf32, #tpu.memory_space<vmem>>, %arg7: memref<1x384xf32, #tpu.memory_space<vmem>>, %arg8: memref<128x384xf32, #tpu.memory_space<vmem>>, %arg9: memref<1x384xf32, #tpu.memory_space<vmem>>, %arg10: memref<128x128xf32, #tpu.memory_space<vmem>>, %arg11: memref<1x128xf32, #tpu.memory_space<vmem>>, %arg12: memref<1x8x128xf32, #tpu.memory_space<vmem>>, %arg13: memref<8x128xf32, #tpu.memory_space<vmem>>) attributes {dimension_semantics = [#tpu.dimension_semantics<parallel>, #tpu.dimension_semantics<arbitrary>], iteration_bounds = array<i64: 1, 1>, scalar_prefetch = 0 : i64, scratch_operands = 1 : i64, tpu.core_type = #tpu.core_type<tc>, window_params = [{transform_indices = @transform_0, window_bounds = array<i64: 1, 8, 48>}, {transform_indices = @transform_1, window_bounds = array<i64: 8, 128>}, {pipeline_mode = #tpu.pipeline_mode<synchronous>, transform_indices = @transform_2, window_bounds = array<i64: 48, 128>}, {pipeline_mode = #tpu.pipeline_mode<synchronous>, transform_indices = @transform_3, window_bounds = array<i64: 1, 128>}, {pipeline_mode = #tpu.pipeline_mode<synchronous>, transform_indices = @transform_4, window_bounds = array<i64: 128, 384>}, {pipeline_mode = #tpu.pipeline_mode<synchronous>, transform_indices = @transform_5, window_bounds = array<i64: 1, 384>}, {pipeline_mode = #tpu.pipeline_mode<synchronous>, transform_indices = @transform_6, window_bounds = array<i64: 128, 384>}, {pipeline_mode = #tpu.pipeline_mode<synchronous>, transform_indices = @transform_7, window_bounds = array<i64: 1, 384>}, {pipeline_mode = #tpu.pipeline_mode<synchronous>, transform_indices = @transform_8, window_bounds = array<i64: 128, 128>}, {pipeline_mode = #tpu.pipeline_mode<synchronous>, transform_indices = @transform_9, window_bounds = array<i64: 1, 128>}, {transform_indices = @transform_10, window_bounds = array<i64: 1, 8, 128>}]} {
    %c0_i32 = arith.constant 0 : i32
    %0 = arith.cmpi eq, %arg1, %c0_i32 : i32
    %1 = arith.extui %0 : i1 to i32
    %c0_i32_0 = arith.constant 0 : i32
    %2 = arith.cmpi ne, %1, %c0_i32_0 : i32
    scf.if %2 {
      %c0_36 = arith.constant 0 : index
      %c0_37 = arith.constant 0 : index
      %74 = vector.load %arg3[%c0_36, %c0_37] : memref<8x128xf32, #tpu.memory_space<vmem>>, vector<8x128xf32>
      %c0_38 = arith.constant 0 : index
      %c0_39 = arith.constant 0 : index
      %75 = vector.load %arg13[%c0_38, %c0_39] : memref<8x128xf32, #tpu.memory_space<vmem>>, vector<8x128xf32>
      tpu.vector_store %arg13[%c0_38, %c0_39], %74 {strides = array<i32>} : memref<8x128xf32, #tpu.memory_space<vmem>>, vector<8x128xf32>,
    } else {
    }
    %c0 = arith.constant 0 : index
    %c0_1 = arith.constant 0 : index
    %3 = vector.load %arg13[%c0, %c0_1] : memref<8x128xf32, #tpu.memory_space<vmem>>, vector<8x128xf32>
    %c0_2 = arith.constant 0 : index
    %c0_3 = arith.constant 0 : index
    %c0_4 = arith.constant 0 : index
    %4 = vector.load %arg2[%c0_2, %c0_3, %c0_4] : memref<1x8x48xf32, #tpu.memory_space<vmem>>, vector<1x8x48xf32>
    %5 = vector.shape_cast %4 : vector<1x8x48xf32> to vector<8x48xf32>
    %c0_5 = arith.constant 0 : index
    %c0_6 = arith.constant 0 : index
    %6 = vector.load %arg4[%c0_5, %c0_6] : memref<48x128xf32, #tpu.memory_space<vmem>>, vector<48x128xf32>
    %cst = arith.constant dense<0.000000e+00> : vector<8x128xf32>
    %7 = tpu.matmul %5, %6, %cst {dimension_numbers = #tpu.dot_dimension_numbers<[1], [0], [0], [1], [0, 0, 1, 1], [], []>} : vector<8x48xf32>, vector<48x128xf32>, vector<8x128xf32> -> vector<8x128xf32>
    %c0_7 = arith.constant 0 : index
    %c0_8 = arith.constant 0 : index
    %8 = vector.load %arg5[%c0_7, %c0_8] : memref<1x128xf32, #tpu.memory_space<vmem>>, vector<1x128xf32>
    %9 = vector.broadcast %8 : vector<1x128xf32> to vector<8x128xf32>
    %10 = arith.addf %7, %9 : vector<8x128xf32>
    %cst_9 = arith.constant 0.000000e+00 : f32
    %11 = vector.broadcast %cst_9 : f32 to vector<8x128xf32>
    %12 = arith.maximumf %10, %11 : vector<8x128xf32>
    %c0_10 = arith.constant 0 : index
    %c0_11 = arith.constant 0 : index
    %13 = vector.load %arg6[%c0_10, %c0_11] : memref<128x384xf32, #tpu.memory_space<vmem>>, vector<128x384xf32>
    %cst_12 = arith.constant dense<0.000000e+00> : vector<8x384xf32>
    %14 = tpu.matmul %12, %13, %cst_12 {dimension_numbers = #tpu.dot_dimension_numbers<[1], [0], [0], [1], [0, 0, 1, 1], [], []>} : vector<8x128xf32>, vector<128x384xf32>, vector<8x384xf32> -> vector<8x384xf32>
    %c0_13 = arith.constant 0 : index
    %c0_14 = arith.constant 0 : index
    %15 = vector.load %arg7[%c0_13, %c0_14] : memref<1x384xf32, #tpu.memory_space<vmem>>, vector<1x384xf32>
    %16 = vector.broadcast %15 : vector<1x384xf32> to vector<8x384xf32>
    %17 = arith.addf %14, %16 : vector<8x384xf32>
    %c0_15 = arith.constant 0 : index
    %c0_16 = arith.constant 0 : index
    %18 = vector.load %arg8[%c0_15, %c0_16] : memref<128x384xf32, #tpu.memory_space<vmem>>, vector<128x384xf32>
    %cst_17 = arith.constant dense<0.000000e+00> : vector<8x384xf32>
    %19 = tpu.matmul %3, %18, %cst_17 {dimension_numbers = #tpu.dot_dimension_numbers<[1], [0], [0], [1], [0, 0, 1, 1], [], []>} : vector<8x128xf32>, vector<128x384xf32>, vector<8x384xf32> -> vector<8x384xf32>
    %c0_18 = arith.constant 0 : index
    %c0_19 = arith.constant 0 : index
    %20 = vector.load %arg9[%c0_18, %c0_19] : memref<1x384xf32, #tpu.memory_space<vmem>>, vector<1x384xf32>
    %21 = vector.broadcast %20 : vector<1x384xf32> to vector<8x384xf32>
    %22 = arith.addf %19, %21 : vector<8x384xf32>
    %23 = vector.extract_strided_slice %17 {offsets = [0, 0], sizes = [8, 128], strides = [1, 1]} : vector<8x384xf32> to vector<8x128xf32>
    %24 = vector.extract_strided_slice %22 {offsets = [0, 0], sizes = [8, 128], strides = [1, 1]} : vector<8x384xf32> to vector<8x128xf32>
    %25 = arith.addf %23, %24 : vector<8x128xf32>
    %26 = arith.negf %25 : vector<8x128xf32>
    %27 = math.exp %26 : vector<8x128xf32>
    %cst_20 = arith.constant 1.000000e+00 : f32
    %28 = vector.broadcast %cst_20 : f32 to vector<8x128xf32>
    %29 = arith.addf %28, %27 : vector<8x128xf32>
    %30 = arith.divf %28, %29 : vector<8x128xf32>
    %31 = vector.extract_strided_slice %17 {offsets = [0, 128], sizes = [8, 128], strides = [1, 1]} : vector<8x384xf32> to vector<8x128xf32>
    %32 = vector.extract_strided_slice %22 {offsets = [0, 128], sizes = [8, 128], strides = [1, 1]} : vector<8x384xf32> to vector<8x128xf32>
    %33 = arith.addf %31, %32 : vector<8x128xf32>
    %34 = arith.negf %33 : vector<8x128xf32>
    %35 = math.exp %34 : vector<8x128xf32>
    %cst_21 = arith.constant 1.000000e+00 : f32
    %36 = vector.broadcast %cst_21 : f32 to vector<8x128xf32>
    %37 = arith.addf %36, %35 : vector<8x128xf32>
    %38 = arith.divf %36, %37 : vector<8x128xf32>
    %39 = vector.extract_strided_slice %17 {offsets = [0, 256], sizes = [8, 128], strides = [1, 1]} : vector<8x384xf32> to vector<8x128xf32>
    %40 = vector.extract_strided_slice %22 {offsets = [0, 256], sizes = [8, 128], strides = [1, 1]} : vector<8x384xf32> to vector<8x128xf32>
    %41 = arith.mulf %30, %40 : vector<8x128xf32>
    %42 = arith.addf %39, %41 : vector<8x128xf32>
    %43 = math.tanh %42 : vector<8x128xf32>
    %cst_22 = arith.constant 1.000000e+00 : f32
    %44 = vector.broadcast %cst_22 : f32 to vector<8x128xf32>
    %45 = arith.subf %44, %38 : vector<8x128xf32>
    %46 = arith.mulf %45, %43 : vector<8x128xf32>
    %47 = arith.mulf %38, %3 : vector<8x128xf32>
    %48 = arith.addf %46, %47 : vector<8x128xf32>
    %c0_23 = arith.constant 0 : index
    %c0_24 = arith.constant 0 : index
    %49 = vector.load %arg13[%c0_23, %c0_24] : memref<8x128xf32, #tpu.memory_space<vmem>>, vector<8x128xf32>
    tpu.vector_store %arg13[%c0_23, %c0_24], %48 {strides = array<i32>} : memref<8x128xf32, #tpu.memory_space<vmem>>, vector<8x128xf32>,
    %c0_25 = arith.constant 0 : index
    %c0_26 = arith.constant 0 : index
    %50 = vector.load %arg10[%c0_25, %c0_26] : memref<128x128xf32, #tpu.memory_space<vmem>>, vector<128x128xf32>
    %cst_27 = arith.constant dense<0.000000e+00> : vector<8x128xf32>
    %51 = tpu.matmul %48, %50, %cst_27 {dimension_numbers = #tpu.dot_dimension_numbers<[1], [0], [0], [1], [0, 0, 1, 1], [], []>} : vector<8x128xf32>, vector<128x128xf32>, vector<8x128xf32> -> vector<8x128xf32>
    %c0_28 = arith.constant 0 : index
    %c0_29 = arith.constant 0 : index
    %52 = vector.load %arg11[%c0_28, %c0_29] : memref<1x128xf32, #tpu.memory_space<vmem>>, vector<1x128xf32>
    %53 = vector.broadcast %52 : vector<1x128xf32> to vector<8x128xf32>
    %54 = arith.addf %51, %53 : vector<8x128xf32>
    %55 = tpu.iota {dimensions = array<i32: 1>} : vector<8x128xi32>
    %c35_i32 = arith.constant 35 : i32
    %56 = vector.broadcast %c35_i32 : i32 to vector<8x128xi32>
    %57 = arith.cmpi sge, %55, %56 : vector<8x128xi32>
    %c38_i32 = arith.constant 38 : i32
    %58 = vector.broadcast %c38_i32 : i32 to vector<8x128xi32>
    %59 = arith.cmpi slt, %55, %58 : vector<8x128xi32>
    %60 = arith.andi %57, %59 : vector<8x128xi1>
    %cst_30 = arith.constant 0.000000e+00 : f32
    %61 = vector.broadcast %cst_30 : f32 to vector<8x128xf32>
    %62 = arith.maximumf %54, %61 : vector<8x128xf32>
    %cst_31 = arith.constant -2.000000e+01 : f32
    %cst_32 = arith.constant 2.000000e+00 : f32
    %63 = vector.broadcast %cst_31 : f32 to vector<8x128xf32>
    %64 = arith.maximumf %63, %62 : vector<8x128xf32>
    %65 = vector.broadcast %cst_32 : f32 to vector<8x128xf32>
    %66 = arith.minimumf %65, %64 : vector<8x128xf32>
    %67 = arith.select %60, %66, %54 : vector<8x128xi1>, vector<8x128xf32>
    %c32_i32 = arith.constant 32 : i32
    %68 = vector.broadcast %c32_i32 : i32 to vector<8x128xi32>
    %69 = arith.cmpi slt, %55, %68 : vector<8x128xi32>
    %70 = arith.select %69, %48, %67 : vector<8x128xi1>, vector<8x128xf32>
    %c0_33 = arith.constant 0 : index
    %c0_34 = arith.constant 0 : index
    %c0_35 = arith.constant 0 : index
    %71 = vector.load %arg12[%c0_33, %c0_34, %c0_35] : memref<1x8x128xf32, #tpu.memory_space<vmem>>, vector<1x8x128xf32>
    %72 = vector.shape_cast %71 : vector<1x8x128xf32> to vector<8x128xf32>
    %73 = vector.shape_cast %70 : vector<8x128xf32> to vector<1x8x128xf32>
    tpu.vector_store %arg12[%c0_33, %c0_34, %c0_35], %73 {strides = array<i32>} : memref<1x8x128xf32, #tpu.memory_space<vmem>>, vector<1x8x128xf32>,
    return
  }
  func.func @transform_0(%arg0: i32, %arg1: i32) -> (i32, i32, i32) {
    %c0_i32 = arith.constant 0 : i32
    %c0_i32_0 = arith.constant 0 : i32
    return %arg1, %arg0, %c0_i32 : i32, i32, i32
  }
  func.func @transform_1(%arg0: i32, %arg1: i32) -> (i32, i32) {
    %c0_i32 = arith.constant 0 : i32
    %c0_i32_0 = arith.constant 0 : i32
    return %arg0, %c0_i32 : i32, i32
  }
  func.func @transform_2(%arg0: i32, %arg1: i32) -> (i32, i32) {
    %c0_i32 = arith.constant 0 : i32
    %c0_i32_0 = arith.constant 0 : i32
    %c0_i32_1 = arith.constant 0 : i32
    return %c0_i32, %c0_i32_0 : i32, i32
  }
  func.func @transform_3(%arg0: i32, %arg1: i32) -> (i32, i32) {
    %c0_i32 = arith.constant 0 : i32
    %c0_i32_0 = arith.constant 0 : i32
    %c0_i32_1 = arith.constant 0 : i32
    return %c0_i32, %c0_i32_0 : i32, i32
  }
  func.func @transform_4(%arg0: i32, %arg1: i32) -> (i32, i32) {
    %c0_i32 = arith.constant 0 : i32
    %c0_i32_0 = arith.constant 0 : i32
    %c0_i32_1 = arith.constant 0 : i32
    return %c0_i32, %c0_i32_0 : i32, i32
  }
  func.func @transform_5(%arg0: i32, %arg1: i32) -> (i32, i32) {
    %c0_i32 = arith.constant 0 : i32
    %c0_i32_0 = arith.constant 0 : i32
    %c0_i32_1 = arith.constant 0 : i32
    return %c0_i32, %c0_i32_0 : i32, i32
  }
  func.func @transform_6(%arg0: i32, %arg1: i32) -> (i32, i32) {
    %c0_i32 = arith.constant 0 : i32
    %c0_i32_0 = arith.constant 0 : i32
    %c0_i32_1 = arith.constant 0 : i32
    return %c0_i32, %c0_i32_0 : i32, i32
  }
  func.func @transform_7(%arg0: i32, %arg1: i32) -> (i32, i32) {
    %c0_i32 = arith.constant 0 : i32
    %c0_i32_0 = arith.constant 0 : i32
    %c0_i32_1 = arith.constant 0 : i32
    return %c0_i32, %c0_i32_0 : i32, i32
  }
  func.func @transform_8(%arg0: i32, %arg1: i32) -> (i32, i32) {
    %c0_i32 = arith.constant 0 : i32
    %c0_i32_0 = arith.constant 0 : i32
    %c0_i32_1 = arith.constant 0 : i32
    return %c0_i32, %c0_i32_0 : i32, i32
  }
  func.func @transform_9(%arg0: i32, %arg1: i32) -> (i32, i32) {
    %c0_i32 = arith.constant 0 : i32
    %c0_i32_0 = arith.constant 0 : i32
    %c0_i32_1 = arith.constant 0 : i32
    return %c0_i32, %c0_i32_0 : i32, i32
  }
  func.func @transform_10(%arg0: i32, %arg1: i32) -> (i32, i32, i32) {
    %c0_i32 = arith.constant 0 : i32
    %c0_i32_0 = arith.constant 0 : i32
    return %arg1, %arg0, %c0_i32 : i32, i32, i32
  }
}

</mosaic_0001>

<llo_original>
// kernel: sac_agent_forward.1
$region0: #{sac_agent_forward.1}
  #allocation0 [shape = 'u32[]', space=smem, size = 0x4, offset = 0x4, fixed_abs, tag = 'smem constant byte address 0x4 - core index']
  #allocation1 [shape = 'u32[144,128]{1,0:T(1,128)}', space=vmem, size = 0x12000, scoped, tag = 'internal scratch']
  #allocation2 [shape = 'f32[8,128]{1,0:T(8,128)}', space=vmem, size = 0x1000, scoped, tag = 'scratch operand']
  %s0 = inlined_call_operand.vmem [shape: f32[1,8,48], index: 0, kind: input, shape index: {}]
  %s1 = inlined_call_operand.vmem [shape: f32[8,128], index: 1, kind: input, shape index: {}]
  %s2 = inlined_call_operand.hbm [shape: f32[48,128], index: 2, kind: input, shape index: {}]
  %s3 = inlined_call_operand.vmem [shape: f32[1,128], index: 3, kind: input, shape index: {}]
  %s4 = inlined_call_operand.hbm [shape: f32[128,384], index: 4, kind: input, shape index: {}]
  %s5 = inlined_call_operand.vmem [shape: f32[1,384], index: 5, kind: input, shape index: {}]
  %s6 = inlined_call_operand.hbm [shape: f32[128,384], index: 6, kind: input, shape index: {}]
  %s7 = inlined_call_operand.vmem [shape: f32[1,384], index: 7, kind: input, shape index: {}]
  %s8 = inlined_call_operand.hbm [shape: f32[128,128], index: 8, kind: input, shape index: {}]
  %s9 = inlined_call_operand.vmem [shape: f32[1,128], index: 9, kind: input, shape index: {}]
  %s10 = inlined_call_operand.vmem [shape: f32[1,8,128], index: 10, kind: output, shape index: {}]
  %s11 = sld [smem:[#allocation0]]
  $region70: #{sac_agent_forward.1} parent=0
    _
  %s13 = ssub.s32 1, %s11
  %s14 = scalar_select 0, %s13, %s11
  $region1: #{sac_agent_forward.1} parent=0
    #allocation3 [shape = 'u8[24576]{0}', space=vmem, size = 0x6000, scoped, tag = 'input window, operand 2, single buffered']
    #allocation4 [shape = 's32[1]{0}', space=sflag, size = 0x4, scoped, tag = 'scoped memory for sac_agent_forward.1']
    #allocation5 [shape = 'u8[196608]{0}', space=vmem, size = 0x30000, scoped, tag = 'input window, operand 4, single buffered']
    #allocation6 [shape = 's32[1]{0}', space=sflag, size = 0x4, scoped, tag = 'scoped memory for sac_agent_forward.1']
    #allocation7 [shape = 'u8[196608]{0}', space=vmem, size = 0x30000, scoped, tag = 'input window, operand 6, single buffered']
    #allocation8 [shape = 'u8[65536]{0}', space=vmem, size = 0x10000, scoped, tag = 'input window, operand 8, single buffered']
    #allocation9 [shape = 's32[1]{0}', space=sflag, size = 0x4, scoped, tag = 'scoped memory for sac_agent_forward.1']
    %15 = vsyncpa [#allocation4], 0
    %16 = vsyncpa [#allocation6], 0
    %17 = vsyncpa [#allocation9], 0
    // Predicated region
    $region2: #{sac_agent_forward.1} parent=1 // pred_check
      _
    $region3: #{sac_agent_forward.1} parent=1 // pred_check_branch
      %19 = sbr.rel (0) target = $region5
    $region4: #{sac_agent_forward.1} parent=1 // pred_region
      _
    $region5: #{sac_agent_forward.1} parent=1 // pred_fallthru
      _
    // Predicated region
    $region6: #{sac_agent_forward.1} parent=1 // pred_check
      _
    $region7: #{sac_agent_forward.1} parent=1 // pred_check_branch
      %21 = sbr.rel (0) target = $region9
    $region8: #{sac_agent_forward.1} parent=1 // pred_region
      _
    $region9: #{sac_agent_forward.1} parent=1 // pred_fallthru
      _
    // Predicated region
    $region10: #{sac_agent_forward.1} parent=1 // pred_check
      _
    $region11: #{sac_agent_forward.1} parent=1 // pred_check_branch
      %23 = sbr.rel (0) target = $region13
    $region12: #{sac_agent_forward.1} parent=1 // pred_region
      %s25 = ssub.s32 768, 768
      %26 = vsyncadd [#allocation4], %s25
      %s27 = sshll.u32 [#allocation3], 4
      %s28 = int_to_ptr.vmem [resolvable:$true] %s27
      %33 = dma.hbm_to_vmem [thread:$0]  %s2, 768, %s28, [#allocation4], 128, 128, 8
    $region13: #{sac_agent_forward.1} parent=1 // pred_fallthru
      _
    // Predicated region
    $region14: #{sac_agent_forward.1} parent=1 // pred_check
      _
    $region15: #{sac_agent_forward.1} parent=1 // pred_check_branch
      %35 = sbr.rel (0) target = $region17
    $region16: #{sac_agent_forward.1} parent=1 // pred_region
      _
    $region17: #{sac_agent_forward.1} parent=1 // pred_fallthru
      _
    // Predicated region
    $region18: #{sac_agent_forward.1} parent=1 // pred_check
      _
    $region19: #{sac_agent_forward.1} parent=1 // pred_check_branch
      %37 = sbr.rel (0) target = $region21
    $region20: #{sac_agent_forward.1} parent=1 // pred_region
      %s39 = ssub.s32 6144, 6144
      %40 = vsyncadd [#allocation6], %s39
      %s41 = sshll.u32 [#allocation5], 4
      %s42 = int_to_ptr.vmem [resolvable:$true] %s41
      %47 = dma.hbm_to_vmem [thread:$0]  %s4, 6144, %s42, [#allocation6], 384, 384, 24
    $region21: #{sac_agent_forward.1} parent=1 // pred_fallthru
      _
    // Predicated region
    $region22: #{sac_agent_forward.1} parent=1 // pred_check
      _
    $region23: #{sac_agent_forward.1} parent=1 // pred_check_branch
      %49 = sbr.rel (0) target = $region25
    $region24: #{sac_agent_forward.1} parent=1 // pred_region
      _
    $region25: #{sac_agent_forward.1} parent=1 // pred_fallthru
      _
    // Predicated region
    $region26: #{sac_agent_forward.1} parent=1 // pred_check
      _
    $region27: #{sac_agent_forward.1} parent=1 // pred_check_branch
      %51 = sbr.rel (0) target = $region29
    $region28: #{sac_agent_forward.1} parent=1 // pred_region
      %s53 = ssub.s32 6144, 6144
      %54 = vsyncadd [#allocation6], %s53
      %s55 = sshll.u32 [#allocation7], 4
      %s56 = int_to_ptr.vmem [resolvable:$true] %s55
      %61 = dma.hbm_to_vmem [thread:$0]  %s6, 6144, %s56, [#allocation6], 384, 384, 24
    $region29: #{sac_agent_forward.1} parent=1 // pred_fallthru
      _
    // Predicated region
    $region30: #{sac_agent_forward.1} parent=1 // pred_check
      _
    $region31: #{sac_agent_forward.1} parent=1 // pred_check_branch
      %63 = sbr.rel (0) target = $region33
    $region32: #{sac_agent_forward.1} parent=1 // pred_region
      _
    $region33: #{sac_agent_forward.1} parent=1 // pred_fallthru
      _
    // Predicated region
    $region34: #{sac_agent_forward.1} parent=1 // pred_check
      _
    $region35: #{sac_agent_forward.1} parent=1 // pred_check_branch
      %65 = sbr.rel (0) target = $region37
    $region36: #{sac_agent_forward.1} parent=1 // pred_region
      %s67 = ssub.s32 2048, 2048
      %68 = vsyncadd [#allocation9], %s67
      %s69 = sshll.u32 [#allocation8], 4
      %s70 = int_to_ptr.vmem [resolvable:$true] %s69
      %75 = dma.hbm_to_vmem [thread:$0]  %s8, 2048, %s70, [#allocation9], 128, 128, 8
    $region37: #{sac_agent_forward.1} parent=1 // pred_fallthru
      _
    // Predicated region
    $region38: #{sac_agent_forward.1} parent=1 // pred_check
      _
    $region39: #{sac_agent_forward.1} parent=1 // pred_check_branch
      %77 = sbr.rel (0) target = $region41
    $region40: #{sac_agent_forward.1} parent=1 // pred_region
      _
    $region41: #{sac_agent_forward.1} parent=1 // pred_fallthru
      _
    // Predicated region
    $region42: #{sac_agent_forward.1} parent=1 // pred_check
      _
    $region43: #{sac_agent_forward.1} parent=1 // pred_check_branch
      %79 = sbr.rel (0) target = $region45
    $region44: #{sac_agent_forward.1} parent=1 // pred_region
      %80 = dma.done [#allocation4], 768
    $region45: #{sac_agent_forward.1} parent=1 // pred_fallthru
      _
    // Predicated region
    $region46: #{sac_agent_forward.1} parent=1 // pred_check
      _
    $region47: #{sac_agent_forward.1} parent=1 // pred_check_branch
      %82 = sbr.rel (0) target = $region49
    $region48: #{sac_agent_forward.1} parent=1 // pred_region
      %83 = dma.done [#allocation6], 6144
    $region49: #{sac_agent_forward.1} parent=1 // pred_fallthru
      _
    // Predicated region
    $region50: #{sac_agent_forward.1} parent=1 // pred_check
      _
    $region51: #{sac_agent_forward.1} parent=1 // pred_check_branch
      %85 = sbr.rel (0) target = $region53
    $region52: #{sac_agent_forward.1} parent=1 // pred_region
      %86 = dma.done [#allocation6], 6144
    $region53: #{sac_agent_forward.1} parent=1 // pred_fallthru
      _
    // Predicated region
    $region54: #{sac_agent_forward.1} parent=1 // pred_check
      _
    $region55: #{sac_agent_forward.1} parent=1 // pred_check_branch
      %88 = sbr.rel (0) target = $region57
    $region56: #{sac_agent_forward.1} parent=1 // pred_region
      %89 = dma.done [#allocation9], 2048
    $region57: #{sac_agent_forward.1} parent=1 // pred_fallthru
      _
    %p90 = scmp.eq.s32.totalorder 0, 0
    // Predicated region
    $region58: #{sac_agent_forward.1} parent=1 // pred_check
      %p91 = pneg %p90
    $region59: #{sac_agent_forward.1} parent=1 // pred_check_branch
      %93 = sbr.rel (%p91) target = $region61
    $region60: #{sac_agent_forward.1} parent=1 // pred_region
      %v94 = vld [vmem:[%s1] sm:$0xff]
      %95 = vst [vmem:[#allocation2] sm:$0xff] %v94
    $region61: #{sac_agent_forward.1} parent=1 // pred_fallthru
      _
    %v96 = vld [vmem:[#allocation2] sm:$0xff]
    %v97 = vld [vmem:[%s0] sm:$0xff]
    %v98 = vld [vmem:[#allocation3] sm:$0xff]
    %v99 = vld [vmem:[#allocation3 + $0x8] sm:$0xff]
    %v100 = vld [vmem:[#allocation3 + $0x10] sm:$0xff]
    %v101 = vld [vmem:[#allocation3 + $0x18] sm:$0xff]
    %v102 = vld [vmem:[#allocation3 + $0x20] sm:$0xff]
    %v103 = vld [vmem:[#allocation3 + $0x28] sm:$0xff]
    %v104 = vld [vmem:[%s3] sm:$0x1]
    %v106 = vlaneseq
    %v107 = vshrl.u32 %v106, 7
    %v108 = vsub.s32 0, %v107
    %v109 = vrot.slane %v104, %v108
    %vm111 = vcmask 392192
    %v113 = vsel %vm111, %v97, 0
    %115 = vmatprep.subr.mxu0 0.0
    %116 = vmatpush1.msra.mxu0 0.0
    %117 = vmatprep.subr.mxu0 0.0
    %118 = vmatpush1.msra.mxu0 0.0
    %119 = vmatprep.subr.mxu0 0.0
    %120 = vmatpush1.msra.mxu0 0.0
    %121 = vmatprep.subr.mxu0 0.0
    %122 = vmatpush1.msra.mxu0 0.0
    %123 = vmatprep.subr.mxu0 0.0
    %124 = vmatpush1.msra.mxu0 0.0
    %125 = vmatprep.subr.mxu0 0.0
    %126 = vmatpush1.msra.mxu0 0.0
    %127 = vmatprep.subr.mxu0 0.0
    %128 = vmatpush1.msra.mxu0 0.0
    %129 = vmatprep.subr.mxu0 0.0
    %130 = vmatpush1.msra.mxu0 0.0
    %131 = vmatprep.subr.mxu0 0.0
    %132 = vmatpush1.msra.mxu0 0.0
    %133 = vmatprep.subr.mxu0 0.0
    %134 = vmatpush1.msra.mxu0 0.0
    %135 = vmatprep.subr.mxu0 0.0
    %136 = vmatpush1.msra.mxu0 %v103
    %137 = vmatprep.subr.mxu0 0.0
    %138 = vmatpush1.msra.mxu0 %v102
    %139 = vmatprep.subr.mxu0 0.0
    %140 = vmatpush1.msra.mxu0 %v101
    %141 = vmatprep.subr.mxu0 0.0
    %142 = vmatpush1.msra.mxu0 %v100
    %143 = vmatprep.subr.mxu0 0.0
    %144 = vmatpush1.msra.mxu0 %v99
    %145 = vmatprep.subr.mxu0 0.0
    %146 = vmatpush1.msra.mxu0 %v98
    %147 = vmatprep.subr.mxu0 0.0
    %148 = vmatpush2.msra.mxu0 0.0
    %149 = vmatprep.subr.mxu0 0.0
    %150 = vmatpush2.msra.mxu0 0.0
    %151 = vmatprep.subr.mxu0 0.0
    %152 = vmatpush2.msra.mxu0 0.0
    %153 = vmatprep.subr.mxu0 0.0
    %154 = vmatpush2.msra.mxu0 0.0
    %155 = vmatprep.subr.mxu0 0.0
    %156 = vmatpush2.msra.mxu0 0.0
    %157 = vmatprep.subr.mxu0 0.0
    %158 = vmatpush2.msra.mxu0 0.0
    %159 = vmatprep.subr.mxu0 0.0
    %160 = vmatpush2.msra.mxu0 0.0
    %161 = vmatprep.subr.mxu0 0.0
    %162 = vmatpush2.msra.mxu0 0.0
    %163 = vmatprep.subr.mxu0 0.0
    %164 = vmatpush2.msra.mxu0 0.0
    %165 = vmatprep.subr.mxu0 0.0
    %166 = vmatpush2.msra.mxu0 0.0
    %167 = vmatprep.subr.mxu0 0.0
    %168 = vmatpush2.msra.mxu0 0.0
    %169 = vmatprep.subr.mxu0 0.0
    %170 = vmatpush2.msra.mxu0 0.0
    %171 = vmatprep.subr.mxu0 0.0
    %172 = vmatpush2.msra.mxu0 0.0
    %173 = vmatprep.subr.mxu0 0.0
    %174 = vmatpush2.msra.mxu0 0.0
    %175 = vmatprep.subr.mxu0 0.0
    %176 = vmatpush2.msra.mxu0 0.0
    %177 = vmatprep.subr.mxu0 0.0
    %178 = vmatpush2.msra.mxu0 0.0
    %179 = vmatprep.mubr.f32.mxu0 0.0
    %180 = vmatmul.mubr.f32.gmra.mxu0 %v113
    %v181 = vpop.f32.mrf.mxu0
    %v182 = vadd.f32 %v109, %v181
    %v183 = vpop.f32.mrf.mxu0
    %184 = vdwg.mxu0
    %v185 = vmax.f32 %v182, 0.0
    %v186 = vld [vmem:[#allocation5] sm:$0xff]
    %v187 = vld [vmem:[#allocation5 + $0x8] sm:$0xff]
    %v188 = vld [vmem:[#allocation5 + $0x10] sm:$0xff]
    %v189 = vld [vmem:[#allocation5 + $0x18] sm:$0xff]
    %v190 = vld [vmem:[#allocation5 + $0x20] sm:$0xff]
    %v191 = vld [vmem:[#allocation5 + $0x28] sm:$0xff]
    %v192 = vld [vmem:[#allocation5 + $0x30] sm:$0xff]
    %v193 = vld [vmem:[#allocation5 + $0x38] sm:$0xff]
    %v194 = vld [vmem:[#allocation5 + $0x40] sm:$0xff]
    %v195 = vld [vmem:[#allocation5 + $0x48] sm:$0xff]
    %v196 = vld [vmem:[#allocation5 + $0x50] sm:$0xff]
    %v197 = vld [vmem:[#allocation5 + $0x58] sm:$0xff]
    %v198 = vld [vmem:[#allocation5 + $0x60] sm:$0xff]
    %v199 = vld [vmem:[#allocation5 + $0x68] sm:$0xff]
    %v200 = vld [vmem:[#allocation5 + $0x70] sm:$0xff]
    %v201 = vld [vmem:[#allocation5 + $0x78] sm:$0xff]
    %v202 = vld [vmem:[#allocation5 + $0x80] sm:$0xff]
    %v203 = vld [vmem:[#allocation5 + $0x88] sm:$0xff]
    %v204 = vld [vmem:[#allocation5 + $0x90] sm:$0xff]
    %v205 = vld [vmem:[#allocation5 + $0x98] sm:$0xff]
    %v206 = vld [vmem:[#allocation5 + $0xa0] sm:$0xff]
    %v207 = vld [vmem:[#allocation5 + $0xa8] sm:$0xff]
    %v208 = vld [vmem:[#allocation5 + $0xb0] sm:$0xff]
    %v209 = vld [vmem:[#allocation5 + $0xb8] sm:$0xff]
    %v210 = vld [vmem:[#allocation5 + $0xc0] sm:$0xff]
    %v211 = vld [vmem:[#allocation5 + $0xc8] sm:$0xff]
    %v212 = vld [vmem:[#allocation5 + $0xd0] sm:$0xff]
    %v213 = vld [vmem:[#allocation5 + $0xd8] sm:$0xff]
    %v214 = vld [vmem:[#allocation5 + $0xe0] sm:$0xff]
    %v215 = vld [vmem:[#allocation5 + $0xe8] sm:$0xff]
    %v216 = vld [vmem:[#allocation5 + $0xf0] sm:$0xff]
    %v217 = vld [vmem:[#allocation5 + $0xf8] sm:$0xff]
    %v218 = vld [vmem:[#allocation5 + $0x100] sm:$0xff]
    %v219 = vld [vmem:[#allocation5 + $0x108] sm:$0xff]
    %v220 = vld [vmem:[#allocation5 + $0x110] sm:$0xff]
    %v221 = vld [vmem:[#allocation5 + $0x118] sm:$0xff]
    %v222 = vld [vmem:[#allocation5 + $0x120] sm:$0xff]
    %v223 = vld [vmem:[#allocation5 + $0x128] sm:$0xff]
    %v224 = vld [vmem:[#allocation5 + $0x130] sm:$0xff]
    %v225 = vld [vmem:[#allocation5 + $0x138] sm:$0xff]
    %v226 = vld [vmem:[#allocation5 + $0x140] sm:$0xff]
    %v227 = vld [vmem:[#allocation5 + $0x148] sm:$0xff]
    %v228 = vld [vmem:[#allocation5 + $0x150] sm:$0xff]
    %v229 = vld [vmem:[#allocation5 + $0x158] sm:$0xff]
    %v230 = vld [vmem:[#allocation5 + $0x160] sm:$0xff]
    %v231 = vld [vmem:[#allocation5 + $0x168] sm:$0xff]
    %v232 = vld [vmem:[#allocation5 + $0x170] sm:$0xff]
    %v233 = vld [vmem:[#allocation5 + $0x178] sm:$0xff]
    %v234 = vld [vmem:[%s5] sm:$0x7]
    %v236 = vlaneseq
    %v237 = vshrl.u32 %v236, 7
    %v238 = vsub.s32 0, %v237
    %v239 = vrot.slane %v234, %v238
    %v240 = vlaneseq
    %v241 = vshrl.u32 %v240, 7
    %v242 = vsub.s32 1, %v241
    %v243 = vrot.slane %v234, %v242
    %v244 = vlaneseq
    %v245 = vshrl.u32 %v244, 7
    %v246 = vsub.s32 2, %v245
    %v247 = vrot.slane %v234, %v246
    %251 = vmatprep.subr.mxu0 %v232
    %252 = vmatpush1.msra.mxu0 %v231
    %253 = vmatprep.subr.mxu0 %v229
    %254 = vmatpush1.msra.mxu0 %v228
    %255 = vmatprep.subr.mxu0 %v226
    %256 = vmatpush1.msra.mxu0 %v225
    %257 = vmatprep.subr.mxu0 %v223
    %258 = vmatpush1.msra.mxu0 %v222
    %259 = vmatprep.subr.mxu0 %v220
    %260 = vmatpush1.msra.mxu0 %v219
    %261 = vmatprep.subr.mxu0 %v217
    %262 = vmatpush1.msra.mxu0 %v216
    %263 = vmatprep.subr.mxu0 %v214
    %264 = vmatpush1.msra.mxu0 %v213
    %265 = vmatprep.subr.mxu0 %v211
    %266 = vmatpush1.msra.mxu0 %v210
    %267 = vmatprep.subr.mxu0 %v208
    %268 = vmatpush1.msra.mxu0 %v207
    %269 = vmatprep.subr.mxu0 %v205
    %270 = vmatpush1.msra.mxu0 %v204
    %271 = vmatprep.subr.mxu0 %v202
    %272 = vmatpush1.msra.mxu0 %v201
    %273 = vmatprep.subr.mxu0 %v199
    %274 = vmatpush1.msra.mxu0 %v198
    %275 = vmatprep.subr.mxu0 %v196
    %276 = vmatpush1.msra.mxu0 %v195
    %277 = vmatprep.subr.mxu0 %v193
    %278 = vmatpush1.msra.mxu0 %v192
    %279 = vmatprep.subr.mxu0 %v190
    %280 = vmatpush1.msra.mxu0 %v189
    %281 = vmatprep.subr.mxu0 %v187
    %282 = vmatpush1.msra.mxu0 %v186
    %283 = vmatprep.subr.mxu0 0.0
    %284 = vmatpush2.msra.mxu0 0.0
    %285 = vmatprep.subr.mxu0 0.0
    %286 = vmatpush2.msra.mxu0 0.0
    %287 = vmatprep.subr.mxu0 0.0
    %288 = vmatpush2.msra.mxu0 0.0
    %289 = vmatprep.subr.mxu0 0.0
    %290 = vmatpush2.msra.mxu0 0.0
    %291 = vmatprep.subr.mxu0 0.0
    %292 = vmatpush2.msra.mxu0 0.0
    %293 = vmatprep.subr.mxu0 0.0
    %294 = vmatpush2.msra.mxu0 0.0
    %295 = vmatprep.subr.mxu0 0.0
    %296 = vmatpush2.msra.mxu0 0.0
    %297 = vmatprep.subr.mxu0 0.0
    %298 = vmatpush2.msra.mxu0 0.0
    %299 = vmatprep.subr.mxu0 0.0
    %300 = vmatpush2.msra.mxu0 0.0
    %301 = vmatprep.subr.mxu0 0.0
    %302 = vmatpush2.msra.mxu0 0.0
    %303 = vmatprep.subr.mxu0 0.0
    %304 = vmatpush2.msra.mxu0 0.0
    %305 = vmatprep.subr.mxu0 0.0
    %306 = vmatpush2.msra.mxu0 0.0
    %307 = vmatprep.subr.mxu0 0.0
    %308 = vmatpush2.msra.mxu0 0.0
    %309 = vmatprep.subr.mxu0 0.0
    %310 = vmatpush2.msra.mxu0 0.0
    %311 = vmatprep.subr.mxu0 0.0
    %312 = vmatpush2.msra.mxu0 0.0
    %313 = vmatprep.subr.mxu0 0.0
    %314 = vmatpush2.msra.mxu0 0.0
    %315 = vmatprep.mubr.f32.mxu0 0.0
    %316 = vmatmul.mubr.f32.gmra.mxu0 %v185
    %v317 = vpop.f32.mrf.mxu0
    %v318 = vadd.f32 %v239, %v317
    %v319 = vpop.f32.mrf.mxu0
    %v320 = vadd.f32 %v243, %v319
    %321 = vdwg.mxu0
    %322 = vmatprep.subr.mxu0 0.0
    %323 = vmatpush1.msra.mxu0 %v233
    %324 = vmatprep.subr.mxu0 0.0
    %325 = vmatpush1.msra.mxu0 %v230
    %326 = vmatprep.subr.mxu0 0.0
    %327 = vmatpush1.msra.mxu0 %v227
    %328 = vmatprep.subr.mxu0 0.0
    %329 = vmatpush1.msra.mxu0 %v224
    %330 = vmatprep.subr.mxu0 0.0
    %331 = vmatpush1.msra.mxu0 %v221
    %332 = vmatprep.subr.mxu0 0.0
    %333 = vmatpush1.msra.mxu0 %v218
    %334 = vmatprep.subr.mxu0 0.0
    %335 = vmatpush1.msra.mxu0 %v215
    %336 = vmatprep.subr.mxu0 0.0
    %337 = vmatpush1.msra.mxu0 %v212
    %338 = vmatprep.subr.mxu0 0.0
    %339 = vmatpush1.msra.mxu0 %v209
    %340 = vmatprep.subr.mxu0 0.0
    %341 = vmatpush1.msra.mxu0 %v206
    %342 = vmatprep.subr.mxu0 0.0
    %343 = vmatpush1.msra.mxu0 %v203
    %344 = vmatprep.subr.mxu0 0.0
    %345 = vmatpush1.msra.mxu0 %v200
    %346 = vmatprep.subr.mxu0 0.0
    %347 = vmatpush1.msra.mxu0 %v197
    %348 = vmatprep.subr.mxu0 0.0
    %349 = vmatpush1.msra.mxu0 %v194
    %350 = vmatprep.subr.mxu0 0.0
    %351 = vmatpush1.msra.mxu0 %v191
    %352 = vmatprep.subr.mxu0 0.0
    %353 = vmatpush1.msra.mxu0 %v188
    %354 = vmatprep.subr.mxu0 0.0
    %355 = vmatpush2.msra.mxu0 0.0
    %356 = vmatprep.subr.mxu0 0.0
    %357 = vmatpush2.msra.mxu0 0.0
    %358 = vmatprep.subr.mxu0 0.0
    %359 = vmatpush2.msra.mxu0 0.0
    %360 = vmatprep.subr.mxu0 0.0
    %361 = vmatpush2.msra.mxu0 0.0
    %362 = vmatprep.subr.mxu0 0.0
    %363 = vmatpush2.msra.mxu0 0.0
    %364 = vmatprep.subr.mxu0 0.0
    %365 = vmatpush2.msra.mxu0 0.0
    %366 = vmatprep.subr.mxu0 0.0
    %367 = vmatpush2.msra.mxu0 0.0
    %368 = vmatprep.subr.mxu0 0.0
    %369 = vmatpush2.msra.mxu0 0.0
    %370 = vmatprep.subr.mxu0 0.0
    %371 = vmatpush2.msra.mxu0 0.0
    %372 = vmatprep.subr.mxu0 0.0
    %373 = vmatpush2.msra.mxu0 0.0
    %374 = vmatprep.subr.mxu0 0.0
    %375 = vmatpush2.msra.mxu0 0.0
    %376 = vmatprep.subr.mxu0 0.0
    %377 = vmatpush2.msra.mxu0 0.0
    %378 = vmatprep.subr.mxu0 0.0
    %379 = vmatpush2.msra.mxu0 0.0
    %380 = vmatprep.subr.mxu0 0.0
    %381 = vmatpush2.msra.mxu0 0.0
    %382 = vmatprep.subr.mxu0 0.0
    %383 = vmatpush2.msra.mxu0 0.0
    %384 = vmatprep.subr.mxu0 0.0
    %385 = vmatpush2.msra.mxu0 0.0
    %386 = vmatprep.mubr.f32.mxu0 0.0
    %387 = vmatmul.mubr.f32.gmra.mxu0 %v185
    %v388 = vpop.f32.mrf.mxu0
    %v389 = vadd.f32 %v247, %v388
    %v390 = vpop.f32.mrf.mxu0
    %391 = vdwg.mxu0
    %v392 = vld [vmem:[#allocation7] sm:$0xff]
    %v393 = vld [vmem:[#allocation7 + $0x8] sm:$0xff]
    %v394 = vld [vmem:[#allocation7 + $0x10] sm:$0xff]
    %v395 = vld [vmem:[#allocation7 + $0x18] sm:$0xff]
    %v396 = vld [vmem:[#allocation7 + $0x20] sm:$0xff]
    %v397 = vld [vmem:[#allocation7 + $0x28] sm:$0xff]
    %v398 = vld [vmem:[#allocation7 + $0x30] sm:$0xff]
    %v399 = vld [vmem:[#allocation7 + $0x38] sm:$0xff]
    %v400 = vld [vmem:[#allocation7 + $0x40] sm:$0xff]
    %v401 = vld [vmem:[#allocation7 + $0x48] sm:$0xff]
    %v402 = vld [vmem:[#allocation7 + $0x50] sm:$0xff]
    %v403 = vld [vmem:[#allocation7 + $0x58] sm:$0xff]
    %v404 = vld [vmem:[#allocation7 + $0x60] sm:$0xff]
    %v405 = vld [vmem:[#allocation7 + $0x68] sm:$0xff]
    %v406 = vld [vmem:[#allocation7 + $0x70] sm:$0xff]
    %v407 = vld [vmem:[#allocation7 + $0x78] sm:$0xff]
    %v408 = vld [vmem:[#allocation7 + $0x80] sm:$0xff]
    %v409 = vld [vmem:[#allocation7 + $0x88] sm:$0xff]
    %v410 = vld [vmem:[#allocation7 + $0x90] sm:$0xff]
    %v411 = vld [vmem:[#allocation7 + $0x98] sm:$0xff]
    %v412 = vld [vmem:[#allocation7 + $0xa0] sm:$0xff]
    %v413 = vld [vmem:[#allocation7 + $0xa8] sm:$0xff]
    %v414 = vld [vmem:[#allocation7 + $0xb0] sm:$0xff]
    %v415 = vld [vmem:[#allocation7 + $0xb8] sm:$0xff]
    %v416 = vld [vmem:[#allocation7 + $0xc0] sm:$0xff]
    %v417 = vld [vmem:[#allocation7 + $0xc8] sm:$0xff]
    %v418 = vld [vmem:[#allocation7 + $0xd0] sm:$0xff]
    %v419 = vld [vmem:[#allocation7 + $0xd8] sm:$0xff]
    %v420 = vld [vmem:[#allocation7 + $0xe0] sm:$0xff]
    %v421 = vld [vmem:[#allocation7 + $0xe8] sm:$0xff]
    %v422 = vld [vmem:[#allocation7 + $0xf0] sm:$0xff]
    %v423 = vld [vmem:[#allocation7 + $0xf8] sm:$0xff]
    %v424 = vld [vmem:[#allocation7 + $0x100] sm:$0xff]
    %v425 = vld [vmem:[#allocation7 + $0x108] sm:$0xff]
    %v426 = vld [vmem:[#allocation7 + $0x110] sm:$0xff]
    %v427 = vld [vmem:[#allocation7 + $0x118] sm:$0xff]
    %v428 = vld [vmem:[#allocation7 + $0x120] sm:$0xff]
    %v429 = vld [vmem:[#allocation7 + $0x128] sm:$0xff]
    %v430 = vld [vmem:[#allocation7 + $0x130] sm:$0xff]
    %v431 = vld [vmem:[#allocation7 + $0x138] sm:$0xff]
    %v432 = vld [vmem:[#allocation7 + $0x140] sm:$0xff]
    %v433 = vld [vmem:[#allocation7 + $0x148] sm:$0xff]
    %v434 = vld [vmem:[#allocation7 + $0x150] sm:$0xff]
    %v435 = vld [vmem:[#allocation7 + $0x158] sm:$0xff]
    %v436 = vld [vmem:[#allocation7 + $0x160] sm:$0xff]
    %v437 = vld [vmem:[#allocation7 + $0x168] sm:$0xff]
    %v438 = vld [vmem:[#allocation7 + $0x170] sm:$0xff]
    %v439 = vld [vmem:[#allocation7 + $0x178] sm:$0xff]
    %v440 = vld [vmem:[%s7] sm:$0x7]
    %v442 = vlaneseq
    %v443 = vshrl.u32 %v442, 7
    %v444 = vsub.s32 0, %v443
    %v445 = vrot.slane %v440, %v444
    %v446 = vlaneseq
    %v447 = vshrl.u32 %v446, 7
    %v448 = vsub.s32 1, %v447
    %v449 = vrot.slane %v440, %v448
    %v450 = vlaneseq
    %v451 = vshrl.u32 %v450, 7
    %v452 = vsub.s32 2, %v451
    %v453 = vrot.slane %v440, %v452
    %457 = vmatprep.subr.mxu0 %v438
    %458 = vmatpush1.msra.mxu0 %v437
    %459 = vmatprep.subr.mxu0 %v435
    %460 = vmatpush1.msra.mxu0 %v434
    %461 = vmatprep.subr.mxu0 %v432
    %462 = vmatpush1.msra.mxu0 %v431
    %463 = vmatprep.subr.mxu0 %v429
    %464 = vmatpush1.msra.mxu0 %v428
    %465 = vmatprep.subr.mxu0 %v426
    %466 = vmatpush1.msra.mxu0 %v425
    %467 = vmatprep.subr.mxu0 %v423
    %468 = vmatpush1.msra.mxu0 %v422
    %469 = vmatprep.subr.mxu0 %v420
    %470 = vmatpush1.msra.mxu0 %v419
    %471 = vmatprep.subr.mxu0 %v417
    %472 = vmatpush1.msra.mxu0 %v416
    %473 = vmatprep.subr.mxu0 %v414
    %474 = vmatpush1.msra.mxu0 %v413
    %475 = vmatprep.subr.mxu0 %v411
    %476 = vmatpush1.msra.mxu0 %v410
    %477 = vmatprep.subr.mxu0 %v408
    %478 = vmatpush1.msra.mxu0 %v407
    %479 = vmatprep.subr.mxu0 %v405
    %480 = vmatpush1.msra.mxu0 %v404
    %481 = vmatprep.subr.mxu0 %v402
    %482 = vmatpush1.msra.mxu0 %v401
    %483 = vmatprep.subr.mxu0 %v399
    %484 = vmatpush1.msra.mxu0 %v398
    %485 = vmatprep.subr.mxu0 %v396
    %486 = vmatpush1.msra.mxu0 %v395
    %487 = vmatprep.subr.mxu0 %v393
    %488 = vmatpush1.msra.mxu0 %v392
    %489 = vmatprep.subr.mxu0 0.0
    %490 = vmatpush2.msra.mxu0 0.0
    %491 = vmatprep.subr.mxu0 0.0
    %492 = vmatpush2.msra.mxu0 0.0
    %493 = vmatprep.subr.mxu0 0.0
    %494 = vmatpush2.msra.mxu0 0.0
    %495 = vmatprep.subr.mxu0 0.0
    %496 = vmatpush2.msra.mxu0 0.0
    %497 = vmatprep.subr.mxu0 0.0
    %498 = vmatpush2.msra.mxu0 0.0
    %499 = vmatprep.subr.mxu0 0.0
    %500 = vmatpush2.msra.mxu0 0.0
    %501 = vmatprep.subr.mxu0 0.0
    %502 = vmatpush2.msra.mxu0 0.0
    %503 = vmatprep.subr.mxu0 0.0
    %504 = vmatpush2.msra.mxu0 0.0
    %505 = vmatprep.subr.mxu0 0.0
    %506 = vmatpush2.msra.mxu0 0.0
    %507 = vmatprep.subr.mxu0 0.0
    %508 = vmatpush2.msra.mxu0 0.0
    %509 = vmatprep.subr.mxu0 0.0
    %510 = vmatpush2.msra.mxu0 0.0
    %511 = vmatprep.subr.mxu0 0.0
    %512 = vmatpush2.msra.mxu0 0.0
    %513 = vmatprep.subr.mxu0 0.0
    %514 = vmatpush2.msra.mxu0 0.0
    %515 = vmatprep.subr.mxu0 0.0
    %516 = vmatpush2.msra.mxu0 0.0
    %517 = vmatprep.subr.mxu0 0.0
    %518 = vmatpush2.msra.mxu0 0.0
    %519 = vmatprep.subr.mxu0 0.0
    %520 = vmatpush2.msra.mxu0 0.0
    %521 = vmatprep.mubr.f32.mxu0 0.0
    %522 = vmatmul.mubr.f32.gmra.mxu0 %v96
    %v523 = vpop.f32.mrf.mxu0
    %v524 = vadd.f32 %v445, %v523
    %v525 = vpop.f32.mrf.mxu0
    %v526 = vadd.f32 %v449, %v525
    %527 = vdwg.mxu0
    %528 = vmatprep.subr.mxu0 0.0
    %529 = vmatpush1.msra.mxu0 %v439
    %530 = vmatprep.subr.mxu0 0.0
    %531 = vmatpush1.msra.mxu0 %v436
    %532 = vmatprep.subr.mxu0 0.0
    %533 = vmatpush1.msra.mxu0 %v433
    %534 = vmatprep.subr.mxu0 0.0
    %535 = vmatpush1.msra.mxu0 %v430
    %536 = vmatprep.subr.mxu0 0.0
    %537 = vmatpush1.msra.mxu0 %v427
    %538 = vmatprep.subr.mxu0 0.0
    %539 = vmatpush1.msra.mxu0 %v424
    %540 = vmatprep.subr.mxu0 0.0
    %541 = vmatpush1.msra.mxu0 %v421
    %542 = vmatprep.subr.mxu0 0.0
    %543 = vmatpush1.msra.mxu0 %v418
    %544 = vmatprep.subr.mxu0 0.0
    %545 = vmatpush1.msra.mxu0 %v415
    %546 = vmatprep.subr.mxu0 0.0
    %547 = vmatpush1.msra.mxu0 %v412
    %548 = vmatprep.subr.mxu0 0.0
    %549 = vmatpush1.msra.mxu0 %v409
    %550 = vmatprep.subr.mxu0 0.0
    %551 = vmatpush1.msra.mxu0 %v406
    %552 = vmatprep.subr.mxu0 0.0
    %553 = vmatpush1.msra.mxu0 %v403
    %554 = vmatprep.subr.mxu0 0.0
    %555 = vmatpush1.msra.mxu0 %v400
    %556 = vmatprep.subr.mxu0 0.0
    %557 = vmatpush1.msra.mxu0 %v397
    %558 = vmatprep.subr.mxu0 0.0
    %559 = vmatpush1.msra.mxu0 %v394
    %560 = vmatprep.subr.mxu0 0.0
    %561 = vmatpush2.msra.mxu0 0.0
    %562 = vmatprep.subr.mxu0 0.0
    %563 = vmatpush2.msra.mxu0 0.0
    %564 = vmatprep.subr.mxu0 0.0
    %565 = vmatpush2.msra.mxu0 0.0
    %566 = vmatprep.subr.mxu0 0.0
    %567 = vmatpush2.msra.mxu0 0.0
    %568 = vmatprep.subr.mxu0 0.0
    %569 = vmatpush2.msra.mxu0 0.0
    %570 = vmatprep.subr.mxu0 0.0
    %571 = vmatpush2.msra.mxu0 0.0
    %572 = vmatprep.subr.mxu0 0.0
    %573 = vmatpush2.msra.mxu0 0.0
    %574 = vmatprep.subr.mxu0 0.0
    %575 = vmatpush2.msra.mxu0 0.0
    %576 = vmatprep.subr.mxu0 0.0
    %577 = vmatpush2.msra.mxu0 0.0
    %578 = vmatprep.subr.mxu0 0.0
    %579 = vmatpush2.msra.mxu0 0.0
    %580 = vmatprep.subr.mxu0 0.0
    %581 = vmatpush2.msra.mxu0 0.0
    %582 = vmatprep.subr.mxu0 0.0
    %583 = vmatpush2.msra.mxu0 0.0
    %584 = vmatprep.subr.mxu0 0.0
    %585 = vmatpush2.msra.mxu0 0.0
    %586 = vmatprep.subr.mxu0 0.0
    %587 = vmatpush2.msra.mxu0 0.0
    %588 = vmatprep.subr.mxu0 0.0
    %589 = vmatpush2.msra.mxu0 0.0
    %590 = vmatprep.subr.mxu0 0.0
    %591 = vmatpush2.msra.mxu0 0.0
    %592 = vmatprep.mubr.f32.mxu0 0.0
    %593 = vmatmul.mubr.f32.gmra.mxu0 %v96
    %v594 = vpop.f32.mrf.mxu0
    %v595 = vadd.f32 %v453, %v594
    %v596 = vpop.f32.mrf.mxu0
    %597 = vdwg.mxu0
    %v598 = vadd.f32 %v318, %v524
    %v599 = vxor.u32 %v598, 2147483648
    %v600 = vmul.f32 %v599, 1.442695
    %v601 = vpow.pop %v600
    %v602 = vadd.f32 %v601, 1.0
    %v603 = vrcp.pop %v602
    %v604 = vmul.f32 1.0, %v603
    %v605 = vadd.f32 %v320, %v526
    %v606 = vxor.u32 %v605, 2147483648
    %v607 = vmul.f32 %v606, 1.442695
    %v608 = vpow.pop %v607
    %v609 = vadd.f32 %v608, 1.0
    %v610 = vrcp.pop %v609
    %v611 = vmul.f32 1.0, %v610
    %v612 = vmul.f32 %v604, %v595
    %v613 = vadd.f32 %v389, %v612
    %v614 = vtanh.pop %v613
    %v615 = vsub.f32 1.0, %v611
    %v616 = vmul.f32 %v615, %v614
    %v617 = vmul.f32 %v611, %v96
    %v618 = vadd.f32 %v616, %v617
    %619 = vst [vmem:[#allocation2] sm:$0xff] %v618
    %v620 = vld [vmem:[#allocation8] sm:$0xff]
    %v621 = vld [vmem:[#allocation8 + $0x8] sm:$0xff]
    %v622 = vld [vmem:[#allocation8 + $0x10] sm:$0xff]
    %v623 = vld [vmem:[#allocation8 + $0x18] sm:$0xff]
    %v624 = vld [vmem:[#allocation8 + $0x20] sm:$0xff]
    %v625 = vld [vmem:[#allocation8 + $0x28] sm:$0xff]
    %v626 = vld [vmem:[#allocation8 + $0x30] sm:$0xff]
    %v627 = vld [vmem:[#allocation8 + $0x38] sm:$0xff]
    %v628 = vld [vmem:[#allocation8 + $0x40] sm:$0xff]
    %v629 = vld [vmem:[#allocation8 + $0x48] sm:$0xff]
    %v630 = vld [vmem:[#allocation8 + $0x50] sm:$0xff]
    %v631 = vld [vmem:[#allocation8 + $0x58] sm:$0xff]
    %v632 = vld [vmem:[#allocation8 + $0x60] sm:$0xff]
    %v633 = vld [vmem:[#allocation8 + $0x68] sm:$0xff]
    %v634 = vld [vmem:[#allocation8 + $0x70] sm:$0xff]
    %v635 = vld [vmem:[#allocation8 + $0x78] sm:$0xff]
    %v636 = vld [vmem:[%s9] sm:$0x1]
    %v638 = vlaneseq
    %v639 = vshrl.u32 %v638, 7
    %v640 = vsub.s32 0, %v639
    %v641 = vrot.slane %v636, %v640
    %643 = vmatprep.subr.mxu0 0.0
    %644 = vmatpush1.msra.mxu0 %v635
    %645 = vmatprep.subr.mxu0 0.0
    %646 = vmatpush1.msra.mxu0 %v634
    %647 = vmatprep.subr.mxu0 0.0
    %648 = vmatpush1.msra.mxu0 %v633
    %649 = vmatprep.subr.mxu0 0.0
    %650 = vmatpush1.msra.mxu0 %v632
    %651 = vmatprep.subr.mxu0 0.0
    %652 = vmatpush1.msra.mxu0 %v631
    %653 = vmatprep.subr.mxu0 0.0
    %654 = vmatpush1.msra.mxu0 %v630
    %655 = vmatprep.subr.mxu0 0.0
    %656 = vmatpush1.msra.mxu0 %v629
    %657 = vmatprep.subr.mxu0 0.0
    %658 = vmatpush1.msra.mxu0 %v628
    %659 = vmatprep.subr.mxu0 0.0
    %660 = vmatpush1.msra.mxu0 %v627
    %661 = vmatprep.subr.mxu0 0.0
    %662 = vmatpush1.msra.mxu0 %v626
    %663 = vmatprep.subr.mxu0 0.0
    %664 = vmatpush1.msra.mxu0 %v625
    %665 = vmatprep.subr.mxu0 0.0
    %666 = vmatpush1.msra.mxu0 %v624
    %667 = vmatprep.subr.mxu0 0.0
    %668 = vmatpush1.msra.mxu0 %v623
    %669 = vmatprep.subr.mxu0 0.0
    %670 = vmatpush1.msra.mxu0 %v622
    %671 = vmatprep.subr.mxu0 0.0
    %672 = vmatpush1.msra.mxu0 %v621
    %673 = vmatprep.subr.mxu0 0.0
    %674 = vmatpush1.msra.mxu0 %v620
    %675 = vmatprep.subr.mxu0 0.0
    %676 = vmatpush2.msra.mxu0 0.0
    %677 = vmatprep.subr.mxu0 0.0
    %678 = vmatpush2.msra.mxu0 0.0
    %679 = vmatprep.subr.mxu0 0.0
    %680 = vmatpush2.msra.mxu0 0.0
    %681 = vmatprep.subr.mxu0 0.0
    %682 = vmatpush2.msra.mxu0 0.0
    %683 = vmatprep.subr.mxu0 0.0
    %684 = vmatpush2.msra.mxu0 0.0
    %685 = vmatprep.subr.mxu0 0.0
    %686 = vmatpush2.msra.mxu0 0.0
    %687 = vmatprep.subr.mxu0 0.0
    %688 = vmatpush2.msra.mxu0 0.0
    %689 = vmatprep.subr.mxu0 0.0
    %690 = vmatpush2.msra.mxu0 0.0
    %691 = vmatprep.subr.mxu0 0.0
    %692 = vmatpush2.msra.mxu0 0.0
    %693 = vmatprep.subr.mxu0 0.0
    %694 = vmatpush2.msra.mxu0 0.0
    %695 = vmatprep.subr.mxu0 0.0
    %696 = vmatpush2.msra.mxu0 0.0
    %697 = vmatprep.subr.mxu0 0.0
    %698 = vmatpush2.msra.mxu0 0.0
    %699 = vmatprep.subr.mxu0 0.0
    %700 = vmatpush2.msra.mxu0 0.0
    %701 = vmatprep.subr.mxu0 0.0
    %702 = vmatpush2.msra.mxu0 0.0
    %703 = vmatprep.subr.mxu0 0.0
    %704 = vmatpush2.msra.mxu0 0.0
    %705 = vmatprep.subr.mxu0 0.0
    %706 = vmatpush2.msra.mxu0 0.0
    %707 = vmatprep.mubr.f32.mxu0 0.0
    %708 = vmatmul.mubr.f32.gmra.mxu0 %v618
    %v709 = vpop.f32.mrf.mxu0
    %v710 = vadd.f32 %v641, %v709
    %v711 = vpop.f32.mrf.mxu0
    %712 = vdwg.mxu0
    %v713 = vlaneseq
    %v714 = vand.u32 %v713, 127
    %vm715 = vcmp.ge.s32.totalorder %v714, 35
    %vm716 = vcmp.lt.s32.totalorder %v714, 38
    %vm717 = vmand %vm715, %vm716
    %v718 = vmax.f32 %v710, 0.0
    %v719 = vmax.f32 %v718, -20.0
    %v720 = vmin.f32 %v719, 2.0
    %v721 = vsel %vm717, %v720, %v710
    %vm722 = vcmp.lt.s32.totalorder %v714, 32
    %v723 = vsel %vm722, %v618, %v721
    %724 = vst [vmem:[%s10] sm:$0xff] %v723
    // Predicated region
    $region62: #{sac_agent_forward.1} parent=1 // pred_check
      _
    $region63: #{sac_agent_forward.1} parent=1 // pred_check_branch
      %726 = sbr.rel (0) target = $region65
    $region64: #{sac_agent_forward.1} parent=1 // pred_region
      _
    $region65: #{sac_agent_forward.1} parent=1 // pred_fallthru
      _
    // Predicated region
    $region66: #{sac_agent_forward.1} parent=1 // pred_check
      _
    $region67: #{sac_agent_forward.1} parent=1 // pred_check_branch
      %728 = sbr.rel (0) target = $region69
    $region68: #{sac_agent_forward.1} parent=1 // pred_region
      _
    $region69: #{sac_agent_forward.1} parent=1 // pred_fallthru
      _
    %729 = vsyncpa [#allocation4], 1
    %730 = vsyncpa [#allocation6], 1
    %731 = vsyncpa [#allocation9], 1

</llo_original>
